<compile_context>
chip_gen: v5e
topology: v5e:2x2
jax: 0.10.0
libtpu: 0.0.40
codegen_flags: <defaults>
</compile_context>

<pallas_src>
import functools
import math

import jax
import jax.numpy as jnp
from jax.experimental import pallas as pl
from jax.experimental.pallas import tpu as pltpu

_LANE = 128
_MAX_TILE_S = 8192                       # 8192 sublanes * 128 lanes * 4B = 4 MiB block
_VMEM_LIMIT = 32 * 1024 * 1024           # explicit scoped-VMEM limit (raises v5e's 16 MiB)


def _round_up(n, m):
    return ((n + m - 1) // m) * m


def _choose_tile_s(S):
    """Sublane tile size.

    - As big as possible (up to 4 MiB f32 blocks) to amortize per-step overhead.
    - At least 2 blocks whenever S > 8, so the 'parallel' axis has something to
      shard across a v7x megacore.
    - Block sublane count is a multiple of 8 (ragged last block is masked by
      Pallas); a single full-array block is used for tiny S.
    """
    if S <= 8:
        return S
    return max(8, min(_MAX_TILE_S, _round_up(pl.cdiv(S, 2), 8)))


def _to_slab(flat, n):
    """flat: (..., n). Pads the last axis to a multiple of 128 only if needed
    and reshapes to (..., S, 128)."""
    n_pad = _round_up(n, _LANE)
    if n_pad != n:
        pad = [(0, 0)] * (flat.ndim - 1) + [(0, n_pad - n)]
        flat = jnp.pad(flat, pad)
    S = n_pad // _LANE
    return flat.reshape(flat.shape[:-1] + (S, _LANE)), S, n_pad


# ----------------------------------------------------------------------------
# T == 0 path: QCFS quantization  y = floor(clamp(x/th,0,1)*L + 0.5) * (th/L)
# ----------------------------------------------------------------------------
def _qcfs_kernel(x_ref, thresh_ref, o_ref, *, L):
    thre = thresh_ref[0]
    inv = 1.0 / thre                       # folded once per tile (scalar unit)
    step = thre * (1.0 / L)                # output quantization step
    x = x_ref[...].astype(jnp.float32) * inv
    x = jnp.clip(x, 0.0, 1.0)
    q = jnp.floor(x * float(L) + 0.5)
    o_ref[...] = (q * step).astype(o_ref.dtype)


@functools.partial(jax.jit, static_argnames=("L",))
def qcfs_forward(x, thresh, L):
    orig_shape = x.shape
    orig_dtype = x.dtype
    n = math.prod(orig_shape)
    x2d, S, n_pad = _to_slab(x.reshape(n), n)
    ts = _choose_tile_s(S)

    out = pl.pallas_call(
        functools.partial(_qcfs_kernel, L=float(L)),
        out_shape=jax.ShapeDtypeStruct((S, _LANE), orig_dtype),
        grid=(pl.cdiv(S, ts),),
        in_specs=[
            pl.BlockSpec((ts, _LANE), lambda i: (i, 0)),
            pl.BlockSpec(memory_space=pltpu.MemorySpace.SMEM),
        ],
        out_specs=pl.BlockSpec((ts, _LANE), lambda i: (i, 0)),
        compiler_params=pltpu.CompilerParams(
            dimension_semantics=("parallel",),
            vmem_limit_bytes=_VMEM_LIMIT),
        cost_estimate=pl.CostEstimate(
            flops=5 * n_pad, transcendentals=0,
            bytes_accessed=2 * n_pad * x.dtype.itemsize),
    )(x2d, thresh.astype(jnp.float32))

    out = out.reshape(n_pad)
    if n_pad != n:
        out = out[:n]
    return out.reshape(orig_shape)


# ----------------------------------------------------------------------------
# T > 0 path: IF neuron over time. Grid = (s_tiles, T) with t innermost; the
# f32 membrane potential lives in a per-tile VMEM scratch that stays resident
# across the whole time loop and is reset at t == 0.
# ----------------------------------------------------------------------------
def _if_kernel(x_ref, thresh_ref, o_ref, mem_ref):
    t = pl.program_id(1)
    thre = thresh_ref[0]

    @pl.when(t == 0)
    def _():
        mem_ref[...] = jnp.zeros_like(mem_ref) + 0.5 * thre

    mem = mem_ref[...] + x_ref[...].astype(jnp.float32)
    spike = jnp.where(mem >= thre, thre, 0.0)
    mem_ref[...] = mem - spike
    o_ref[...] = spike.astype(o_ref.dtype)


def _if_kernel_masked(x_ref, thresh_ref, mask_ref, o_ref, mem_ref):
    t = pl.program_id(1)
    thre = thresh_ref[0]

    @pl.when(t == 0)
    def _():
        mem_ref[...] = jnp.zeros_like(mem_ref) + 0.5 * thre

    mem = mem_ref[...] + x_ref[...].astype(jnp.float32)
    spike = jnp.where(mem >= thre, thre, 0.0)
    spike = spike * mask_ref[...].astype(jnp.float32)   # bf16 0/1 mask (exact)
    mem_ref[...] = mem - spike
    o_ref[...] = spike.astype(o_ref.dtype)


@functools.partial(jax.jit, static_argnames=("T",))
def if_forward(x, thresh, channel_mask, T):
    """x: merged (T*B, C, H, W); channel_mask: None or (C,)."""
    TB = x.shape[0]
    B = TB // T
    body_shape = (B,) + x.shape[1:]
    n = math.prod(body_shape)
    orig_dtype = x.dtype

    x_slab, S, n_pad = _to_slab(x.reshape(T, n), n)
    ts = _choose_tile_s(S)
    grid = (pl.cdiv(S, ts), T)                  # t innermost: mem/mask stay resident
    x_spec = pl.BlockSpec((None, ts, _LANE), lambda s, t: (t, s, 0))
    o_spec = pl.BlockSpec((None, ts, _LANE), lambda s, t: (t, s, 0))
    thresh_spec = pl.BlockSpec(memory_space=pltpu.MemorySpace.SMEM)
    scratch = [pltpu.VMEM((ts, _LANE), jnp.float32)]
    cparams = pltpu.CompilerParams(
        dimension_semantics=("parallel", "arbitrary"),
        vmem_limit_bytes=_VMEM_LIMIT)
    out_shape = jax.ShapeDtypeStruct((T, S, _LANE), orig_dtype)
    ce = pl.CostEstimate(flops=4 * T * n_pad, transcendentals=0,
                         bytes_accessed=2 * T * n_pad * x.dtype.itemsize)

    if channel_mask is None:
        out = pl.pallas_call(
            _if_kernel, out_shape=out_shape, grid=grid,
            in_specs=[x_spec, thresh_spec], out_specs=o_spec,
            scratch_shapes=scratch, compiler_params=cparams,
            cost_estimate=ce,
        )(x_slab, thresh.astype(jnp.float32))
    else:
        # Per-channel mask broadcast to one timestep, built directly in bf16
        # inside this jit (fused; no extra eager HBM round-trips). DMA'd once
        # per s-tile and reused across the whole time loop (t-invariant map).
        C = x.shape[1]
        mask_full = jnp.broadcast_to(
            channel_mask.reshape((1, C) + (1,) * (x.ndim - 2)).astype(jnp.bfloat16),
            body_shape).reshape(n)
        mask_slab, _, _ = _to_slab(mask_full, n)
        mask_spec = pl.BlockSpec((ts, _LANE), lambda s, t: (s, 0))
        out = pl.pallas_call(
            _if_kernel_masked, out_shape=out_shape, grid=grid,
            in_specs=[x_spec, thresh_spec, mask_spec], out_specs=o_spec,
            scratch_shapes=scratch, compiler_params=cparams,
            cost_estimate=ce,
        )(x_slab, thresh.astype(jnp.float32), mask_slab)

    out = out.reshape(T, n_pad)
    if n_pad != n:
        out = out[:, :n]
    return out.reshape((TB,) + x.shape[1:])


# ----------------------------------------------------------------------------
# Module wrapper (parameters initialized deterministically in-script)
# ----------------------------------------------------------------------------
class StructuredPruningIF:
    def __init__(self, T=0, L=8, thresh=8.0, tau=1.0, gama=1.0,
                 channel_pruning_ratio=0.0):
        self.thresh = jnp.array([thresh], dtype=jnp.float32)  # nn.Parameter([thresh])
        self.tau = tau
        self.gama = gama
        self.L = L
        self.T = T
        self.loss = 0
        self.channel_pruning_ratio = channel_pruning_ratio
        self.channel_mask = None

    def compute_channel_importance(self, x):
        # TODO(synk): faithful to the original code, which applies (B,C,H,W)-style
        # reductions to the *expanded* (T,B,C,H,W) tensor; the resulting score
        # axes only line up with channels when B == 1 (dead code for ratio=0).
        l2_norm = jnp.linalg.norm(
            x.reshape(x.shape[0], x.shape[1], -1), axis=2)
        activation_freq = (x > 0).astype(jnp.float32).mean(axis=(0, 2, 3))
        return 0.7 * l2_norm.mean(0) + 0.3 * activation_freq

    def update_channel_mask(self, importance_scores):
        if self.channel_pruning_ratio > 0:
            num_channels = importance_scores.shape[0]
            num_pruned = int(num_channels * self.channel_pruning_ratio)
            if num_pruned > 0:
                idx = jnp.argsort(importance_scores)[:num_pruned]   # smallest-k
                self.channel_mask = jnp.ones_like(importance_scores).at[idx].set(0.0)

    def __call__(self, x):
        if self.T > 0:
            # Only pay the extra full-tensor HBM reads when pruning is enabled.
            if self.channel_pruning_ratio > 0:
                T = self.T
                B = x.shape[0] // T
                x_exp = x.reshape((T, B) + x.shape[1:])
                scores = self.compute_channel_importance(x_exp)
                self.update_channel_mask(scores)
            mask = None
            if self.channel_mask is not None:
                mask = jnp.asarray(self.channel_mask).reshape(-1)
            return if_forward(x, self.thresh, mask, T=self.T)
        return qcfs_forward(x, self.thresh, L=self.L)


# ----------------------------------------------------------------------------
# Pure-JAX references for verification
# ----------------------------------------------------------------------------
def ref_qcfs(x, thresh, L):
    t = thresh[0]
    y = jnp.clip(x.astype(jnp.float32) / t, 0.0, 1.0)
    y = jnp.floor(y * L + 0.5) / L
    return y * t


def ref_if(x, thresh, T, mask=None):
    B = x.shape[0] // T
    xs = x.reshape((T, B) + x.shape[1:]).astype(jnp.float32)
    thre = thresh[0]
    mem = 0.5 * thre * jnp.ones(xs.shape[1:], jnp.float32)
    outs = []
    for t in range(T):
        mem = mem + xs[t]
        spike = jnp.where(mem - thre >= 0, thre, 0.0)
        if mask is not None:
            spike = spike * mask.reshape((1, -1, 1, 1))
        mem = mem - spike
        outs.append(spike)
    y = jnp.stack(outs, 0)
    return y.reshape((T * B,) + y.shape[2:])


if __name__ == "__main__":
    key = jax.random.PRNGKey(0)
    k1, k2, k3 = jax.random.split(key, 3)

    # --- T == 0 branch (QCFS quantization): batch=2, C=4, 16x16 ---
    x0 = jax.random.normal(k1, (2, 4, 16, 16), dtype=jnp.float32)
    mod0 = StructuredPruningIF(T=0, L=8, thresh=1.0)
    y0 = jax.block_until_ready(mod0(x0))
    assert y0.shape == x0.shape and y0.dtype == x0.dtype
    assert jnp.allclose(y0, ref_qcfs(x0, mod0.thresh, mod0.L), atol=1e-5)

    # Ragged size (n % 128 != 0) exercises the pad/unpad path.
    xr = jax.random.normal(k3, (3, 5, 7, 9), dtype=jnp.float32)
    yr = jax.block_until_ready(qcfs_forward(xr, mod0.thresh, L=8))
    assert jnp.allclose(yr, ref_qcfs(xr, mod0.thresh, 8), atol=1e-5)

    # --- T > 0 branch (IF spiking dynamics): T=4, B=2, C=8, 16x16 ---
    T, B, C, H, W = 4, 2, 8, 16, 16
    x1 = jax.random.normal(k2, (T * B, C, H, W), dtype=jnp.float32)
    mod1 = StructuredPruningIF(T=T, L=8, thresh=1.0, channel_pruning_ratio=0.0)
    y1 = jax.block_until_ready(mod1(x1))
    assert y1.shape == x1.shape
    y1_ref = ref_if(x1, mod1.thresh, T, None)
    assert jnp.allclose(y1, y1_ref, atol=1e-5)

    # Masked IF path (per-channel mask of length C, as the original applies it).
    cmask = jnp.array([1, 0, 1, 1, 0, 1, 1, 1], dtype=jnp.float32)
    y1m = jax.block_until_ready(if_forward(x1, mod1.thresh, cmask, T=T))
    assert jnp.allclose(y1m, ref_if(x1, mod1.thresh, T, cmask), atol=1e-5)

    # Native bf16 input: kernel reads bf16, computes in f32, writes bf16
    # (spike values {0, thresh} are bf16-exact for thresh=1.0).
    x1b = x1.astype(jnp.bfloat16)
    y1b = jax.block_until_ready(if_forward(x1b, mod1.thresh, None, T=T))
    assert y1b.dtype == jnp.bfloat16
    assert jnp.allclose(y1b.astype(jnp.float32),
                        ref_if(x1b, mod1.thresh, T, None), atol=1e-5)

    print("KERNEL_OK")
</pallas_src>

<mosaic_0001>
module attributes {stable_mosaic.version = 11 : i64} {
  func.func @_qcfs_kernel(%arg0: i32, %arg1: memref<8x128xf32, #tpu.memory_space<vmem>>, %arg2: memref<1xf32, #tpu.memory_space<smem>>, %arg3: memref<8x128xf32, #tpu.memory_space<vmem>>) attributes {dimension_semantics = [#tpu.dimension_semantics<parallel>], iteration_bounds = array<i64: 2>, scalar_prefetch = 0 : i64, scratch_operands = 0 : i64, tpu.core_type = #tpu.core_type<tc>, window_params = [{transform_indices = @transform_0, window_bounds = array<i64: 8, 128>}, {transform_indices = @transform_1, window_bounds = array<i64: 1>}, {transform_indices = @transform_2, window_bounds = array<i64: 8, 128>}]} {
    %c0 = arith.constant 0 : index
    %0 = memref.load %arg2[%c0] : memref<1xf32, #tpu.memory_space<smem>>
    %cst = arith.constant 1.000000e+00 : f32
    %1 = arith.divf %cst, %0 : f32
    %cst_0 = arith.constant 1.250000e-01 : f32
    %2 = arith.mulf %0, %cst_0 : f32
    %c0_1 = arith.constant 0 : index
    %c0_2 = arith.constant 0 : index
    %3 = vector.load %arg1[%c0_1, %c0_2] : memref<8x128xf32, #tpu.memory_space<vmem>>, vector<8x128xf32>
    %4 = vector.broadcast %1 : f32 to vector<8x128xf32>
    %5 = arith.mulf %3, %4 : vector<8x128xf32>
    %cst_3 = arith.constant 0.000000e+00 : f32
    %cst_4 = arith.constant 1.000000e+00 : f32
    %6 = vector.broadcast %cst_3 : f32 to vector<8x128xf32>
    %7 = arith.maximumf %6, %5 : vector<8x128xf32>
    %8 = vector.broadcast %cst_4 : f32 to vector<8x128xf32>
    %9 = arith.minimumf %8, %7 : vector<8x128xf32>
    %cst_5 = arith.constant 8.000000e+00 : f32
    %10 = vector.broadcast %cst_5 : f32 to vector<8x128xf32>
    %11 = arith.mulf %9, %10 : vector<8x128xf32>
    %cst_6 = arith.constant 5.000000e-01 : f32
    %12 = vector.broadcast %cst_6 : f32 to vector<8x128xf32>
    %13 = arith.addf %11, %12 : vector<8x128xf32>
    %14 = math.floor %13 : vector<8x128xf32>
    %15 = vector.broadcast %2 : f32 to vector<8x128xf32>
    %16 = arith.mulf %14, %15 : vector<8x128xf32>
    %c0_7 = arith.constant 0 : index
    %c0_8 = arith.constant 0 : index
    %17 = vector.load %arg3[%c0_7, %c0_8] : memref<8x128xf32, #tpu.memory_space<vmem>>, vector<8x128xf32>
    tpu.vector_store %arg3[%c0_7, %c0_8], %16 {strides = array<i32>} : memref<8x128xf32, #tpu.memory_space<vmem>>, vector<8x128xf32>,
    return
  }
  func.func @transform_0(%arg0: i32) -> (i32, i32) {
    %c0_i32 = arith.constant 0 : i32
    %c0_i32_0 = arith.constant 0 : i32
    return %arg0, %c0_i32 : i32, i32
  }
  func.func @transform_1(%arg0: i32) -> i32 {
    %c0_i32 = arith.constant 0 : i32
    %c0_i32_0 = arith.constant 0 : i32
    return %c0_i32 : i32
  }
  func.func @transform_2(%arg0: i32) -> (i32, i32) {
    %c0_i32 = arith.constant 0 : i32
    %c0_i32_0 = arith.constant 0 : i32
    return %arg0, %c0_i32 : i32, i32
  }
}

</mosaic_0001>

<llo_original>
// kernel: qcfs_forward.1
$region0: #{qcfs_forward.1}
  #allocation0 [shape = 'u32[]', space=smem, size = 0x4, offset = 0x4, fixed_abs, tag = 'smem constant byte address 0x4 - core index']
  #allocation1 [shape = 'u32[72,128]{1,0:T(1,128)}', space=vmem, size = 0x9000, scoped, tag = 'internal scratch']
  #allocation2 [shape = 'f32[1]{0:T(128)S(6)}', space=smem, size = 0x200, scoped, tag = 'scoped memory for qcfs_forward.1']
  %s0 = inlined_call_operand.vmem [shape: f32[16,128], index: 0, kind: input, shape index: {}]
  %s1 = inlined_call_operand.<no memory space> [shape: f32[1], index: 1, kind: input, shape index: {}]
  %s2 = inlined_call_operand.vmem [shape: f32[16,128], index: 2, kind: output, shape index: {}]
  %s3 = sld [smem:[#allocation0]]
  $region41: #{qcfs_forward.1} parent=0
    _
  %s5 = ssub.s32 1, %s3
  %s6 = scalar_select 0, %s5, %s3
  %7 = sst [smem:[#allocation2]] %s1
  loop: start=0, step=1, limit=4
  $region2: #{qcfs_forward.1} parent=0 // loop_pre_header
    _
  $region3: #{qcfs_forward.1} parent=0 // loop_header
    %s9 = sphi 0, %s13
    %p10 = scmp.ge.s32.totalorder %s9, 4
    %s19 = sphi 0, %s21
    %s22 = sphi 0, %s19
    %s23 = sphi 0, %s22
    %s39 = sphi 0, %s23
    %s43 = sphi 0, %s43
    %s45 = sphi 0, %s43
    %s46 = sphi 0, %s45
    %s60 = sphi 0, %s46
    %s66 = sphi 0, %s68
    %s69 = sphi 0, %s66
    %s70 = sphi 0, %s69
    %s86 = sphi 0, %s70
  $region4: #{qcfs_forward.1} parent=0 // loop_header_branch
    %12 = sbr.rel (%p10) target = $region8
  $region5: #{qcfs_forward.1} parent=0 // loop_body
    %s14 = ssub.s32 %s9, 1
    %s15 = ssub.s32 %s9, 2
    %s16 = sadd.s32 %s9, 1
    %s17 = ssub.s32 %s9, %s16
    %p18 = scmp.eq.s32.totalorder %s17, 0
    %s20 = sadd.s32 %s19, 1
    %s21 = scalar_select %p18, %s19, %s20
    %p24 = pneg %p18
    %p25 = scmp.eq.s32.totalorder %s9, 1
    %p26 = por %p24, %p25
    %p27 = scmp.ne.s32.totalorder %s19, %s22
    %p28 = scmp.eq.s32.totalorder %s9, 0
    %p29 = por %p27, %p28
    %p30 = scmp.ne.s32.totalorder %s19, %s22
    %p31 = scmp.eq.s32.totalorder %s14, 1
    %p32 = por %p30, %p31
    %p33 = scmp.ne.s32.totalorder %s22, %s23
    %p34 = scmp.eq.s32.totalorder %s14, 0
    %p35 = por %p33, %p34
    %p36 = scmp.ne.s32.totalorder %s22, %s23
    %p37 = scmp.eq.s32.totalorder %s15, 1
    %p38 = por %p36, %p37
    %p40 = scmp.ne.s32.totalorder %s23, %s39
    %p41 = scmp.eq.s32.totalorder %s15, 0
    %p42 = por %p40, %p41
    %s44 = sadd.s32 %s43, 1
    %p47 = scmp.eq.s32.totalorder %s9, 1
    %p48 = scmp.ne.s32.totalorder %s43, %s45
    %p49 = scmp.eq.s32.totalorder %s9, 0
    %p50 = por %p48, %p49
    %p51 = scmp.ne.s32.totalorder %s43, %s45
    %p52 = scmp.eq.s32.totalorder %s14, 1
    %p53 = por %p51, %p52
    %p54 = scmp.ne.s32.totalorder %s45, %s46
    %p55 = scmp.eq.s32.totalorder %s14, 0
    %p56 = por %p54, %p55
    %p57 = scmp.ne.s32.totalorder %s45, %s46
    %p58 = scmp.eq.s32.totalorder %s15, 1
    %p59 = por %p57, %p58
    %p61 = scmp.ne.s32.totalorder %s46, %s60
    %p62 = scmp.eq.s32.totalorder %s15, 0
    %p63 = por %p61, %p62
    %s64 = ssub.s32 %s9, %s16
    %p65 = scmp.eq.s32.totalorder %s64, 0
    %s67 = sadd.s32 %s66, 1
    %s68 = scalar_select %p65, %s66, %s67
    %p71 = pneg %p65
    %p72 = scmp.eq.s32.totalorder %s9, 1
    %p73 = por %p71, %p72
    %p74 = scmp.ne.s32.totalorder %s66, %s69
    %p75 = scmp.eq.s32.totalorder %s9, 0
    %p76 = por %p74, %p75
    %p77 = scmp.ne.s32.totalorder %s66, %s69
    %p78 = scmp.eq.s32.totalorder %s14, 1
    %p79 = por %p77, %p78
    %p80 = scmp.ne.s32.totalorder %s69, %s70
    %p81 = scmp.eq.s32.totalorder %s14, 0
    %p82 = por %p80, %p81
    %p83 = scmp.ne.s32.totalorder %s69, %s70
    %p84 = scmp.eq.s32.totalorder %s15, 1
    %p85 = por %p83, %p84
    %p87 = scmp.ne.s32.totalorder %s70, %s86
    %p88 = scmp.eq.s32.totalorder %s15, 0
    %p89 = por %p87, %p88
    %p90 = scmp.le.s32.totalorder 1, %s9
    %p91 = scmp.lt.s32.totalorder %s9, 3
    %p92 = pnand %p90, %p91
    %p93 = pneg %p92
    // Predicated region
    $region9: #{qcfs_forward.1} parent=5 // pred_check
      _
    $region10: #{qcfs_forward.1} parent=5 // pred_check_branch
      %95 = sbr.rel (%p92) target = $region12
    $region11: #{qcfs_forward.1} parent=5 // pred_region
      %s96 = ssub.s32 %s9, 1
      // Predicated region
      $region13: #{qcfs_forward.1} parent=11 // pred_check
        %p97 = pneg %p56
      $region14: #{qcfs_forward.1} parent=11 // pred_check_branch
        %99 = sbr.rel (%p97) target = $region16
      $region15: #{qcfs_forward.1} parent=11 // pred_region
        _
      $region16: #{qcfs_forward.1} parent=11 // pred_fallthru
        _
    $region12: #{qcfs_forward.1} parent=5 // pred_fallthru
      _
    %p100 = scmp.lt.s32.totalorder %s9, 2
    // Predicated region
    $region17: #{qcfs_forward.1} parent=5 // pred_check
      %p101 = pneg %p100
    $region18: #{qcfs_forward.1} parent=5 // pred_check_branch
      %103 = sbr.rel (%p101) target = $region20
    $region19: #{qcfs_forward.1} parent=5 // pred_region
      // Predicated region
      $region21: #{qcfs_forward.1} parent=19 // pred_check
        %p104 = pneg %p29
      $region22: #{qcfs_forward.1} parent=19 // pred_check_branch
        %106 = sbr.rel (%p104) target = $region24
      $region23: #{qcfs_forward.1} parent=19 // pred_region
        %p107 = scmp.lt.s32.totalorder %s9, 1
        %s108 = scalar_select %p107, %s9, 1
        %s109 = smul.addr %s108, 8
        %s110 = scalar_lea.vmem %s0, %s109
      $region24: #{qcfs_forward.1} parent=19 // pred_fallthru
        _
    $region20: #{qcfs_forward.1} parent=5 // pred_fallthru
      _
    %p111 = scmp.le.s32.totalorder 1, %s9
    %p112 = scmp.lt.s32.totalorder %s9, 3
    %p113 = pnand %p111, %p112
    %p114 = pneg %p113
    // Predicated region
    $region25: #{qcfs_forward.1} parent=5 // pred_check
      _
    $region26: #{qcfs_forward.1} parent=5 // pred_check_branch
      %116 = sbr.rel (%p113) target = $region28
    $region27: #{qcfs_forward.1} parent=5 // pred_region
      %s117 = ssub.s32 %s9, 1
      %p118 = scmp.lt.s32.totalorder %s14, 1
      %s119 = scalar_select %p118, %s14, 1
      %s120 = smul.addr %s119, 8
      %s121 = scalar_lea.vmem %s0, %s120
      %p122 = pneg %p35
      %p123 = pneg %p32
      %p124 = pneg %p56
      %p125 = pneg %p53
      %p126 = pneg %p82
      %p127 = pneg %p79
      %p128 = scmp.lt.s32.totalorder %s14, 1
      %s129 = scalar_select %p128, %s14, 1
      %s130 = smul.addr %s129, 8
      %s131 = scalar_lea.vmem %s2, %s130
      %p132 = scmp.lt.s32.totalorder %s14, 1
      %s133 = scalar_select %p132, %s14, 1
      %s134 = smul.addr %s133, 8
      %s135 = scalar_lea.vmem %s0, %s134
      %p136 = scmp.lt.s32.totalorder %s14, 1
      %s137 = scalar_select %p136, %s14, 1
      %s138 = smul.addr %s137, 8
      %s139 = scalar_lea.vmem %s2, %s138
      %s140 = sld [smem:[#allocation2]]
      %v141 = vstv %s140
      %v142 = vrcp.pop %v141
      %v143 = vmul.f32 %v141, %v142
      %v144 = vsub.f32 1.0, %v143
      %v145 = vmul.f32 %v142, %v144
      %v146 = vadd.f32 %v142, %v145
      %vm147 = vweird.f32 %v141
      %vm148 = vweird.f32 %v142
      %vm149 = vmor %vm147, %vm148
      %v150 = vsel %vm149, %v142, %v146
      %v151 = vand.u32 2147483647, %v141
      %vm152 = vcmp.eq.f32.partialorder %v151, 8.507059e+37
      %v153 = vand.u32 %v141, 2147483648
      %v154 = vor.u32 1.1754944e-38, %v153
      %v155 = vsel %vm152, %v154, %v150
      %s156 = vtos %v155
      %s157 = smul.f32 %s140, 0.125
      %v158 = vld [vmem:[%s135] sm:$0xff]
      %v159 = vstv %s156
      %v160 = vmul.f32 %v158, %v159
      %v161 = vmax.f32 %v160, 0.0
      %v162 = vmin.f32 %v161, 1.0
      %v163 = vmul.f32 %v162, 8.0
      %v164 = vadd.f32 %v163, 0.5
      %v165 = vfloor.f32 %v164
      %v166 = vstv %s157
      %v167 = vmul.f32 %v165, %v166
      %168 = vst [vmem:[%s139] sm:$0xff] %v167
      %p169 = scmp.lt.s32.totalorder %s14, 1
      %s170 = scalar_select %p169, %s14, 1
      %s171 = smul.addr %s170, 8
      %s172 = scalar_lea.vmem %s2, %s171
      // Predicated region
      $region29: #{qcfs_forward.1} parent=27 // pred_check
        %p173 = pneg %p79
      $region30: #{qcfs_forward.1} parent=27 // pred_check_branch
        %175 = sbr.rel (%p173) target = $region32
      $region31: #{qcfs_forward.1} parent=27 // pred_region
        _
      $region32: #{qcfs_forward.1} parent=27 // pred_fallthru
        _
    $region28: #{qcfs_forward.1} parent=5 // pred_fallthru
      _
    %p176 = scmp.le.s32.totalorder 2, %s9
    // Predicated region
    $region33: #{qcfs_forward.1} parent=5 // pred_check
      %p177 = pneg %p176
    $region34: #{qcfs_forward.1} parent=5 // pred_check_branch
      %179 = sbr.rel (%p177) target = $region36
    $region35: #{qcfs_forward.1} parent=5 // pred_region
      %s180 = ssub.s32 %s9, 2
      // Predicated region
      $region37: #{qcfs_forward.1} parent=35 // pred_check
        %p181 = pneg %p85
      $region38: #{qcfs_forward.1} parent=35 // pred_check_branch
        %183 = sbr.rel (%p181) target = $region40
      $region39: #{qcfs_forward.1} parent=35 // pred_region
        %p184 = scmp.lt.s32.totalorder %s15, 1
        %s185 = scalar_select %p184, %s15, 1
        %s186 = smul.addr %s185, 8
        %s187 = scalar_lea.vmem %s2, %s186
      $region40: #{qcfs_forward.1} parent=35 // pred_fallthru
        _
    $region36: #{qcfs_forward.1} parent=5 // pred_fallthru
      _
  $region6: #{qcfs_forward.1} parent=0 // loop_footer
    %s13 = sadd.s32 1, %s9
  $region7: #{qcfs_forward.1} parent=0 // loop_footer_branch
    %8 = sbr.rel target = $region3
  $region8: #{qcfs_forward.1} parent=0 // loop_exit
    _

</llo_original>
